<compile_context>
chip_gen: v5e
topology: v5e:2x2
jax: 0.10.0
libtpu: 0.0.40
codegen_flags: <defaults>
</compile_context>

<pallas_src>
import jax
import jax.numpy as jnp
from jax.experimental import pallas as pl
from jax.experimental.pallas import tpu as pltpu


def _round_up(n, m):
    return (n + m - 1) // m * m


# --------------------------------------------------------------------------
# Kernels
# --------------------------------------------------------------------------
def _fused_two_layer_kernel(xq_ref, w1_ref, b1_ref, w2_ref, b2_ref, o_ref):
    """Two causal Conv1d(k=3, s=2) + ReLU layers for one batch element.

    xq_ref: (t2 + 1, 4*C)   padded input, 4 consecutive timesteps per row
                            (row m = x_pad[4m .. 4m+3]; x_pad has 2 left zeros)
    w1_ref: (3*C, H1p)      layer-1 weights, taps stacked along rows (bf16)
    b1_ref: (1, H1p)        layer-1 bias (f32)
    w2_ref: (3*H1p, H2p)    layer-2 weights, taps stacked along rows (bf16)
    b2_ref: (1, H2p)        layer-2 bias (f32)
    o_ref:  (t2, H2p)       final output
    """
    t2 = o_ref.shape[0]
    c = xq_ref.shape[1] // 4
    h1p = w2_ref.shape[0] // 3

    xq = xq_ref[...]                       # (t2+1, 4C)
    w1 = w1_ref[...]                       # (3C, H1p)

    # ---- Layer 1: even / odd output timesteps as dense matmuls -------------
    # h1[2m]   = x_pad[4m]  @W0 + x_pad[4m+1]@W1 + x_pad[4m+2]@W2
    # h1[2m+1] = x_pad[4m+2]@W0 + x_pad[4m+3]@W1 + x_pad[4m+4]@W2
    e = jnp.dot(xq[:t2, : 3 * c], w1, preferred_element_type=jnp.float32)
    d = jnp.dot(xq[:t2, 2 * c:], w1[: 2 * c], preferred_element_type=jnp.float32)
    d = d + jnp.dot(xq[1:, :c], w1[2 * c:], preferred_element_type=jnp.float32)
    b1 = b1_ref[...]
    ev = jnp.maximum(e + b1, 0.0).astype(xq.dtype)   # h1[2m],   m in [0, t2)
    od = jnp.maximum(d + b1, 0.0).astype(xq.dtype)   # h1[2m+1], m in [0, t2)

    # ---- Layer 2 (causal left-pad of 2 expressed as a 1-row shift) ----------
    # y[o] = h1[2o-2]@W0 + h1[2o-1]@W1 + h1[2o]@W2 + b   (first two terms are
    #        zero for o == 0)
    w2 = w2_ref[...]                       # (3*H1p, H2p)
    acc = jnp.dot(ev, w2[2 * h1p:], preferred_element_type=jnp.float32)
    if t2 > 1:
        ed = jnp.concatenate([ev[: t2 - 1], od[: t2 - 1]], axis=1)  # (t2-1, 2*H1p)
        prev = jnp.dot(ed, w2[: 2 * h1p], preferred_element_type=jnp.float32)
        acc = acc + jnp.concatenate(
            [jnp.zeros((1, acc.shape[1]), jnp.float32), prev], axis=0)
    acc = acc + b2_ref[...]
    o_ref[...] = jnp.maximum(acc, 0.0).astype(o_ref.dtype)


def _single_layer_kernel(xp_ref, w_ref, b_ref, o_ref):
    """One causal Conv1d(k=3, s=2) + ReLU for one batch element (sub_layers=1).

    xp_ref: (t1 + 1, 2*C)  padded input, 2 consecutive timesteps per row
    w_ref:  (3*C, Hp)      weights, taps stacked along rows (bf16)
    b_ref:  (1, Hp)        bias (f32)
    o_ref:  (t1, Hp)
    """
    t1 = o_ref.shape[0]
    c = xp_ref.shape[1] // 2
    xp = xp_ref[...]
    w = w_ref[...]
    acc = jnp.dot(xp[:t1], w[: 2 * c], preferred_element_type=jnp.float32)
    acc = acc + jnp.dot(xp[1:, :c], w[2 * c:], preferred_element_type=jnp.float32)
    acc = acc + b_ref[...]
    o_ref[...] = jnp.maximum(acc, 0.0).astype(o_ref.dtype)


# --------------------------------------------------------------------------
# Wrappers
# --------------------------------------------------------------------------
def _pack_weights(w_pt, bias, cin_pad, cout_pad, dtype):
    """PyTorch Conv1d weight (C_out, C_in, 3) -> (3*cin_pad, cout_pad) with the
    taps stacked along the contraction dim; bias -> (1, cout_pad) f32."""
    cout, cin, k = w_pt.shape
    w = jnp.transpose(w_pt, (2, 1, 0))                          # (3, C_in, C_out)
    w = jnp.pad(w, ((0, 0), (0, cin_pad - cin), (0, cout_pad - cout)))
    w = w.reshape(k * cin_pad, cout_pad).astype(dtype)
    b = jnp.pad(bias, (0, cout_pad - cout)).reshape(1, cout_pad)
    return w, b.astype(jnp.float32)


def _conv1d_subsample_fused2(x, p1, p2, *, compute_dtype=jnp.bfloat16):
    """x: (B, T, C) -> (B, ceil(ceil(T/2)/2), H2); both layers in one kernel."""
    (w1_pt, b1), (w2_pt, b2) = p1, p2
    B, T, C = x.shape
    H1, H2 = w1_pt.shape[0], w2_pt.shape[0]
    h1p, h2p = _round_up(H1, 128), _round_up(H2, 128)
    t1 = (T + 1) // 2
    t2 = (t1 + 1) // 2

    w1k, b1k = _pack_weights(w1_pt, b1, C, h1p, compute_dtype)
    w2k, b2k = _pack_weights(w2_pt, b2, h1p, h2p, compute_dtype)

    # Causal left-pad (2) + right-pad to length 4*(t2+1); the quad reshape is
    # contiguous (free).  All inter-layer padding/activation stays on-chip.
    pad_len = 4 * (t2 + 1)
    x_pad = jnp.pad(x.astype(compute_dtype),
                    ((0, 0), (2, pad_len - 2 - T), (0, 0)))
    xq = x_pad.reshape(B, t2 + 1, 4 * C)

    out = pl.pallas_call(
        _fused_two_layer_kernel,
        out_shape=jax.ShapeDtypeStruct((B, t2, h2p), x.dtype),
        grid_spec=pltpu.PrefetchScalarGridSpec(
            num_scalar_prefetch=0,
            grid=(B,),
            in_specs=[
                pl.BlockSpec((pl.Squeezed(), t2 + 1, 4 * C), lambda i: (i, 0, 0)),
                pl.BlockSpec((3 * C, h1p), lambda i: (0, 0)),
                pl.BlockSpec((1, h1p), lambda i: (0, 0)),
                pl.BlockSpec((3 * h1p, h2p), lambda i: (0, 0)),
                pl.BlockSpec((1, h2p), lambda i: (0, 0)),
            ],
            out_specs=pl.BlockSpec((pl.Squeezed(), t2, h2p),
                                   lambda i: (i, 0, 0)),
        ),
        compiler_params=pltpu.CompilerParams(
            dimension_semantics=("parallel",)),
    )(xq, w1k, b1k, w2k, b2k)
    return out[..., :H2]


def _conv1d_subsample_single(x, p, *, compute_dtype=jnp.bfloat16):
    """sub_layers == 1 path: single causal Conv1d(k=3, s=2) + ReLU."""
    w_pt, bias = p
    B, T, C = x.shape
    H = w_pt.shape[0]
    hp = _round_up(H, 128)
    t1 = (T + 1) // 2
    wk, bk = _pack_weights(w_pt, bias, C, hp, compute_dtype)

    pad_len = 2 * (t1 + 1)
    x_pad = jnp.pad(x.astype(compute_dtype),
                    ((0, 0), (2, pad_len - 2 - T), (0, 0)))
    xp = x_pad.reshape(B, t1 + 1, 2 * C)

    out = pl.pallas_call(
        _single_layer_kernel,
        out_shape=jax.ShapeDtypeStruct((B, t1, hp), x.dtype),
        grid_spec=pltpu.PrefetchScalarGridSpec(
            num_scalar_prefetch=0,
            grid=(B,),
            in_specs=[
                pl.BlockSpec((pl.Squeezed(), t1 + 1, 2 * C), lambda i: (i, 0, 0)),
                pl.BlockSpec((3 * C, hp), lambda i: (0, 0)),
                pl.BlockSpec((1, hp), lambda i: (0, 0)),
            ],
            out_specs=pl.BlockSpec((pl.Squeezed(), t1, hp),
                                   lambda i: (i, 0, 0)),
        ),
        compiler_params=pltpu.CompilerParams(
            dimension_semantics=("parallel",)),
    )(xp, wk, bk)
    return out[..., :H]


def conv1d_subsampling(x, params):
    """x: (B, T, D_in) -> (B, ceil(T / 2**len(params)), hidden)."""
    if len(params) == 2:
        return _conv1d_subsample_fused2(x, params[0], params[1])
    assert len(params) == 1
    return _conv1d_subsample_single(x, params[0])


# --------------------------------------------------------------------------
# Params + pure-JAX reference
# --------------------------------------------------------------------------
def init_params(key, sub_layers, input_dim, conv_hidden_size, hidden_size):
    """Deterministic init in PyTorch Conv1d layout: weight (C_out, C_in, 3)."""
    if sub_layers == 2:
        dims = [(input_dim, conv_hidden_size), (conv_hidden_size, hidden_size)]
    else:
        dims = [(input_dim, hidden_size)]
    params = []
    for (cin, cout) in dims:
        key, kw, kb = jax.random.split(key, 3)
        bound = 1.0 / jnp.sqrt(jnp.asarray(cin * 3, jnp.float32))
        w_pt = jax.random.uniform(kw, (cout, cin, 3), jnp.float32, -bound, bound)
        b = jax.random.uniform(kb, (cout,), jnp.float32, -bound, bound)
        params.append((w_pt, b))
    return params


def _reference(x, params):
    """Pure-JAX f32 reference (causal SamePad + Conv1d(k=3, s=2) + ReLU)."""
    h = x
    for (w_pt, b) in params:
        w_wio = jnp.transpose(w_pt, (2, 1, 0))          # (3, C_in, C_out)
        y = jax.lax.conv_general_dilated(
            h, w_wio, window_strides=(2,), padding=[(2, 0)],
            dimension_numbers=("NWC", "WIO", "NWC"))
        h = jnp.maximum(y + b[None, None, :], 0.0)
    return h


# --------------------------------------------------------------------------
if __name__ == "__main__":
    B, T, D_IN = 2, 16, 32
    CONV_HIDDEN, HIDDEN = 24, 32
    SUB_LAYERS = 2

    key = jax.random.PRNGKey(0)
    key, kx = jax.random.split(key)
    x = jax.random.normal(kx, (B, T, D_IN), jnp.float32)

    params = init_params(key, SUB_LAYERS, D_IN, CONV_HIDDEN, HIDDEN)

    out = jax.block_until_ready(conv1d_subsampling(x, params))

    expected_t = T
    for _ in range(SUB_LAYERS):
        expected_t = (expected_t + 1) // 2
    assert out.shape == (B, expected_t, HIDDEN), out.shape

    ref = jax.block_until_ready(_reference(x, params))
    assert jnp.allclose(out, ref, atol=2e-2, rtol=2e-2), (
        float(jnp.max(jnp.abs(out - ref))))

    print("KERNEL_OK")
</pallas_src>

<mosaic_0001>
module attributes {stable_mosaic.version = 11 : i64} {
  func.func @_fused_two_layer_kernel(%arg0: i32, %arg1: memref<1x5x128xbf16, #tpu.memory_space<vmem>>, %arg2: memref<96x128xbf16, #tpu.memory_space<vmem>>, %arg3: memref<1x128xf32, #tpu.memory_space<vmem>>, %arg4: memref<384x128xbf16, #tpu.memory_space<vmem>>, %arg5: memref<1x128xf32, #tpu.memory_space<vmem>>, %arg6: memref<1x4x128xf32, #tpu.memory_space<vmem>>) attributes {dimension_semantics = [#tpu.dimension_semantics<parallel>], iteration_bounds = array<i64: 2>, scalar_prefetch = 0 : i64, scratch_operands = 0 : i64, tpu.core_type = #tpu.core_type<tc>, window_params = [{transform_indices = @transform_0, window_bounds = array<i64: 1, 5, 128>}, {pipeline_mode = #tpu.pipeline_mode<synchronous>, transform_indices = @transform_1, window_bounds = array<i64: 96, 128>}, {pipeline_mode = #tpu.pipeline_mode<synchronous>, transform_indices = @transform_2, window_bounds = array<i64: 1, 128>}, {pipeline_mode = #tpu.pipeline_mode<synchronous>, transform_indices = @transform_3, window_bounds = array<i64: 384, 128>}, {pipeline_mode = #tpu.pipeline_mode<synchronous>, transform_indices = @transform_4, window_bounds = array<i64: 1, 128>}, {transform_indices = @transform_5, window_bounds = array<i64: 1, 4, 128>}]} {
    %c0 = arith.constant 0 : index
    %c0_0 = arith.constant 0 : index
    %c0_1 = arith.constant 0 : index
    %0 = vector.load %arg1[%c0, %c0_0, %c0_1] : memref<1x5x128xbf16, #tpu.memory_space<vmem>>, vector<1x5x128xbf16>
    %1 = vector.shape_cast %0 : vector<1x5x128xbf16> to vector<5x128xbf16>
    %c0_2 = arith.constant 0 : index
    %c0_3 = arith.constant 0 : index
    %2 = vector.load %arg2[%c0_2, %c0_3] : memref<96x128xbf16, #tpu.memory_space<vmem>>, vector<96x128xbf16>
    %3 = vector.extract_strided_slice %1 {offsets = [0, 0], sizes = [4, 96], strides = [1, 1]} : vector<5x128xbf16> to vector<4x96xbf16>
    %cst = arith.constant dense<0.000000e+00> : vector<4x128xf32>
    %4 = tpu.matmul %3, %2, %cst {dimension_numbers = #tpu.dot_dimension_numbers<[1], [0], [0], [1], [0, 0, 1, 1], [], []>} : vector<4x96xbf16>, vector<96x128xbf16>, vector<4x128xf32> -> vector<4x128xf32>
    %5 = vector.extract_strided_slice %1 {offsets = [0, 64], sizes = [4, 64], strides = [1, 1]} : vector<5x128xbf16> to vector<4x64xbf16>
    %6 = vector.extract_strided_slice %2 {offsets = [0, 0], sizes = [64, 128], strides = [1, 1]} : vector<96x128xbf16> to vector<64x128xbf16>
    %cst_4 = arith.constant dense<0.000000e+00> : vector<4x128xf32>
    %7 = tpu.matmul %5, %6, %cst_4 {dimension_numbers = #tpu.dot_dimension_numbers<[1], [0], [0], [1], [0, 0, 1, 1], [], []>} : vector<4x64xbf16>, vector<64x128xbf16>, vector<4x128xf32> -> vector<4x128xf32>
    %8 = vector.extract_strided_slice %1 {offsets = [1, 0], sizes = [4, 32], strides = [1, 1]} : vector<5x128xbf16> to vector<4x32xbf16>
    %9 = vector.extract_strided_slice %2 {offsets = [64, 0], sizes = [32, 128], strides = [1, 1]} : vector<96x128xbf16> to vector<32x128xbf16>
    %cst_5 = arith.constant dense<0.000000e+00> : vector<4x128xf32>
    %10 = tpu.matmul %8, %9, %cst_5 {dimension_numbers = #tpu.dot_dimension_numbers<[1], [0], [0], [1], [0, 0, 1, 1], [], []>} : vector<4x32xbf16>, vector<32x128xbf16>, vector<4x128xf32> -> vector<4x128xf32>
    %11 = arith.addf %7, %10 : vector<4x128xf32>
    %c0_6 = arith.constant 0 : index
    %c0_7 = arith.constant 0 : index
    %12 = vector.load %arg3[%c0_6, %c0_7] : memref<1x128xf32, #tpu.memory_space<vmem>>, vector<1x128xf32>
    %13 = vector.broadcast %12 : vector<1x128xf32> to vector<4x128xf32>
    %14 = arith.addf %4, %13 : vector<4x128xf32>
    %cst_8 = arith.constant 0.000000e+00 : f32
    %15 = vector.broadcast %cst_8 : f32 to vector<4x128xf32>
    %16 = arith.maximumf %14, %15 : vector<4x128xf32>
    %17 = arith.truncf %16 : vector<4x128xf32> to vector<4x128xbf16>
    %18 = vector.broadcast %12 : vector<1x128xf32> to vector<4x128xf32>
    %19 = arith.addf %11, %18 : vector<4x128xf32>
    %cst_9 = arith.constant 0.000000e+00 : f32
    %20 = vector.broadcast %cst_9 : f32 to vector<4x128xf32>
    %21 = arith.maximumf %19, %20 : vector<4x128xf32>
    %22 = arith.truncf %21 : vector<4x128xf32> to vector<4x128xbf16>
    %c0_10 = arith.constant 0 : index
    %c0_11 = arith.constant 0 : index
    %23 = vector.load %arg4[%c0_10, %c0_11] : memref<384x128xbf16, #tpu.memory_space<vmem>>, vector<384x128xbf16>
    %24 = vector.extract_strided_slice %23 {offsets = [256, 0], sizes = [128, 128], strides = [1, 1]} : vector<384x128xbf16> to vector<128x128xbf16>
    %cst_12 = arith.constant dense<0.000000e+00> : vector<4x128xf32>
    %25 = tpu.matmul %17, %24, %cst_12 {dimension_numbers = #tpu.dot_dimension_numbers<[1], [0], [0], [1], [0, 0, 1, 1], [], []>} : vector<4x128xbf16>, vector<128x128xbf16>, vector<4x128xf32> -> vector<4x128xf32>
    %26 = vector.extract_strided_slice %17 {offsets = [0, 0], sizes = [3, 128], strides = [1, 1]} : vector<4x128xbf16> to vector<3x128xbf16>
    %27 = vector.extract_strided_slice %22 {offsets = [0, 0], sizes = [3, 128], strides = [1, 1]} : vector<4x128xbf16> to vector<3x128xbf16>
    %28 = tpu.concatenate %26, %27 in 1 : vector<3x128xbf16>, vector<3x128xbf16> -> vector<3x256xbf16>
    %29 = vector.extract_strided_slice %23 {offsets = [0, 0], sizes = [256, 128], strides = [1, 1]} : vector<384x128xbf16> to vector<256x128xbf16>
    %cst_13 = arith.constant dense<0.000000e+00> : vector<3x128xf32>
    %30 = tpu.matmul %28, %29, %cst_13 {dimension_numbers = #tpu.dot_dimension_numbers<[1], [0], [0], [1], [0, 0, 1, 1], [], []>} : vector<3x256xbf16>, vector<256x128xbf16>, vector<3x128xf32> -> vector<3x128xf32>
    %cst_14 = arith.constant 0.000000e+00 : f32
    %31 = vector.broadcast %cst_14 : f32 to vector<1x128xf32>
    %32 = tpu.concatenate %31, %30 in 0 : vector<1x128xf32>, vector<3x128xf32> -> vector<4x128xf32>
    %33 = arith.addf %25, %32 : vector<4x128xf32>
    %c0_15 = arith.constant 0 : index
    %c0_16 = arith.constant 0 : index
    %34 = vector.load %arg5[%c0_15, %c0_16] : memref<1x128xf32, #tpu.memory_space<vmem>>, vector<1x128xf32>
    %35 = vector.broadcast %34 : vector<1x128xf32> to vector<4x128xf32>
    %36 = arith.addf %33, %35 : vector<4x128xf32>
    %cst_17 = arith.constant 0.000000e+00 : f32
    %37 = vector.broadcast %cst_17 : f32 to vector<4x128xf32>
    %38 = arith.maximumf %36, %37 : vector<4x128xf32>
    %c0_18 = arith.constant 0 : index
    %c0_19 = arith.constant 0 : index
    %c0_20 = arith.constant 0 : index
    %39 = vector.load %arg6[%c0_18, %c0_19, %c0_20] : memref<1x4x128xf32, #tpu.memory_space<vmem>>, vector<1x4x128xf32>
    %40 = vector.shape_cast %39 : vector<1x4x128xf32> to vector<4x128xf32>
    %41 = vector.shape_cast %38 : vector<4x128xf32> to vector<1x4x128xf32>
    tpu.vector_store %arg6[%c0_18, %c0_19, %c0_20], %41 {strides = array<i32>} : memref<1x4x128xf32, #tpu.memory_space<vmem>>, vector<1x4x128xf32>,
    return
  }
  func.func @transform_0(%arg0: i32) -> (i32, i32, i32) {
    %c0_i32 = arith.constant 0 : i32
    %c0_i32_0 = arith.constant 0 : i32
    %c0_i32_1 = arith.constant 0 : i32
    return %arg0, %c0_i32, %c0_i32_0 : i32, i32, i32
  }
  func.func @transform_1(%arg0: i32) -> (i32, i32) {
    %c0_i32 = arith.constant 0 : i32
    %c0_i32_0 = arith.constant 0 : i32
    %c0_i32_1 = arith.constant 0 : i32
    return %c0_i32, %c0_i32_0 : i32, i32
  }
  func.func @transform_2(%arg0: i32) -> (i32, i32) {
    %c0_i32 = arith.constant 0 : i32
    %c0_i32_0 = arith.constant 0 : i32
    %c0_i32_1 = arith.constant 0 : i32
    return %c0_i32, %c0_i32_0 : i32, i32
  }
  func.func @transform_3(%arg0: i32) -> (i32, i32) {
    %c0_i32 = arith.constant 0 : i32
    %c0_i32_0 = arith.constant 0 : i32
    %c0_i32_1 = arith.constant 0 : i32
    return %c0_i32, %c0_i32_0 : i32, i32
  }
  func.func @transform_4(%arg0: i32) -> (i32, i32) {
    %c0_i32 = arith.constant 0 : i32
    %c0_i32_0 = arith.constant 0 : i32
    %c0_i32_1 = arith.constant 0 : i32
    return %c0_i32, %c0_i32_0 : i32, i32
  }
  func.func @transform_5(%arg0: i32) -> (i32, i32, i32) {
    %c0_i32 = arith.constant 0 : i32
    %c0_i32_0 = arith.constant 0 : i32
    %c0_i32_1 = arith.constant 0 : i32
    return %arg0, %c0_i32, %c0_i32_0 : i32, i32, i32
  }
}

</mosaic_0001>

<llo_original>
// kernel: tpu_custom_call.1
$region0: #{tpu_custom_call.1}
  #allocation0 [shape = 'u32[]', space=smem, size = 0x4, offset = 0x4, fixed_abs, tag = 'smem constant byte address 0x4 - core index']
  #allocation1 [shape = 'u32[72,128]{1,0:T(1,128)}', space=vmem, size = 0x9000, scoped, tag = 'internal scratch']
  %s0 = inlined_call_operand.vmem [shape: bf16[2,5,128], index: 0, kind: input, shape index: {}]
  %s1 = inlined_call_operand.hbm [shape: bf16[96,128], index: 1, kind: input, shape index: {}]
  %s2 = inlined_call_operand.vmem [shape: f32[1,128], index: 2, kind: input, shape index: {}]
  %s3 = inlined_call_operand.hbm [shape: bf16[384,128], index: 3, kind: input, shape index: {}]
  %s4 = inlined_call_operand.vmem [shape: f32[1,128], index: 4, kind: input, shape index: {}]
  %s5 = inlined_call_operand.hbm [shape: f32[2,4,128], index: 5, kind: output, shape index: {}]
  %s6 = sld [smem:[#allocation0]]
  $region61: #{tpu_custom_call.1} parent=0
    _
  %s8 = ssub.s32 1, %s6
  %s9 = scalar_select 0, %s8, %s6
  $region1: #{tpu_custom_call.1} parent=0
    #allocation2 [shape = 'u8[24576]{0}', space=vmem, size = 0x6000, scoped, tag = 'input window, operand 1, single buffered']
    #allocation3 [shape = 's32[2]{0}', space=sflag, size = 0x8, scoped, tag = 'scoped memory for tpu_custom_call.1']
    #allocation4 [shape = 's32[2]{0}', space=sflag, size = 0x8, scoped, tag = 'scoped memory for tpu_custom_call.1']
    #allocation5 [shape = 'u8[98304]{0}', space=vmem, size = 0x18000, scoped, tag = 'input window, operand 3, single buffered']
    #allocation6 [shape = 's32[1]{0}', space=sflag, size = 0x4, scoped, tag = 'scoped memory for tpu_custom_call.1']
    #allocation7 [shape = 'u8[4096]{0}', space=vmem, size = 0x1000, scoped, tag = 'output window, operand 0']
    %10 = vsyncpa [#allocation3], 0
    %11 = vsyncpa [#allocation6], 0
    %12 = vsyncpa [#allocation4], 0
    %s13 = scalar_lea.sflag [#allocation4], 1
    %14 = vsyncpa %s13, 0
    loop: start=0, step=1, limit=4
    $region2: #{tpu_custom_call.1} parent=1 // loop_pre_header
      _
    $region3: #{tpu_custom_call.1} parent=1 // loop_header
      %s16 = sphi 0, %s20
      %p17 = scmp.ge.s32.totalorder %s16, 4
      %s26 = sphi 0, %s28
      %s29 = sphi 0, %s26
      %s30 = sphi 0, %s29
      %s46 = sphi 0, %s30
      %s50 = sphi 0, %s50
      %s52 = sphi 0, %s50
      %s53 = sphi 0, %s52
      %s67 = sphi 0, %s53
      %s71 = sphi 0, %s71
      %s73 = sphi 0, %s71
      %s74 = sphi 0, %s73
      %s88 = sphi 0, %s74
      %s92 = sphi 0, %s92
      %s94 = sphi 0, %s92
      %s95 = sphi 0, %s94
      %s109 = sphi 0, %s95
      %s113 = sphi 0, %s113
      %s115 = sphi 0, %s113
      %s116 = sphi 0, %s115
      %s130 = sphi 0, %s116
      %s136 = sphi 0, %s138
      %s139 = sphi 0, %s136
      %s140 = sphi 0, %s139
      %s156 = sphi 0, %s140
    $region4: #{tpu_custom_call.1} parent=1 // loop_header_branch
      %19 = sbr.rel (%p17) target = $region8
    $region5: #{tpu_custom_call.1} parent=1 // loop_body
      %s21 = ssub.s32 %s16, 1
      %s22 = ssub.s32 %s16, 2
      %s23 = sadd.s32 %s16, 1
      %s24 = ssub.s32 %s16, %s23
      %p25 = scmp.eq.s32.totalorder %s24, 0
      %s27 = sadd.s32 %s26, 1
      %s28 = scalar_select %p25, %s26, %s27
      %p31 = pneg %p25
      %p32 = scmp.eq.s32.totalorder %s16, 1
      %p33 = por %p31, %p32
      %p34 = scmp.ne.s32.totalorder %s26, %s29
      %p35 = scmp.eq.s32.totalorder %s16, 0
      %p36 = por %p34, %p35
      %p37 = scmp.ne.s32.totalorder %s26, %s29
      %p38 = scmp.eq.s32.totalorder %s21, 1
      %p39 = por %p37, %p38
      %p40 = scmp.ne.s32.totalorder %s29, %s30
      %p41 = scmp.eq.s32.totalorder %s21, 0
      %p42 = por %p40, %p41
      %p43 = scmp.ne.s32.totalorder %s29, %s30
      %p44 = scmp.eq.s32.totalorder %s22, 1
      %p45 = por %p43, %p44
      %p47 = scmp.ne.s32.totalorder %s30, %s46
      %p48 = scmp.eq.s32.totalorder %s22, 0
      %p49 = por %p47, %p48
      %s51 = sadd.s32 %s50, 1
      %p54 = scmp.eq.s32.totalorder %s16, 1
      %p55 = scmp.ne.s32.totalorder %s50, %s52
      %p56 = scmp.eq.s32.totalorder %s16, 0
      %p57 = por %p55, %p56
      %p58 = scmp.ne.s32.totalorder %s50, %s52
      %p59 = scmp.eq.s32.totalorder %s21, 1
      %p60 = por %p58, %p59
      %p61 = scmp.ne.s32.totalorder %s52, %s53
      %p62 = scmp.eq.s32.totalorder %s21, 0
      %p63 = por %p61, %p62
      %p64 = scmp.ne.s32.totalorder %s52, %s53
      %p65 = scmp.eq.s32.totalorder %s22, 1
      %p66 = por %p64, %p65
      %p68 = scmp.ne.s32.totalorder %s53, %s67
      %p69 = scmp.eq.s32.totalorder %s22, 0
      %p70 = por %p68, %p69
      %s72 = sadd.s32 %s71, 1
      %p75 = scmp.eq.s32.totalorder %s16, 1
      %p76 = scmp.ne.s32.totalorder %s71, %s73
      %p77 = scmp.eq.s32.totalorder %s16, 0
      %p78 = por %p76, %p77
      %p79 = scmp.ne.s32.totalorder %s71, %s73
      %p80 = scmp.eq.s32.totalorder %s21, 1
      %p81 = por %p79, %p80
      %p82 = scmp.ne.s32.totalorder %s73, %s74
      %p83 = scmp.eq.s32.totalorder %s21, 0
      %p84 = por %p82, %p83
      %p85 = scmp.ne.s32.totalorder %s73, %s74
      %p86 = scmp.eq.s32.totalorder %s22, 1
      %p87 = por %p85, %p86
      %p89 = scmp.ne.s32.totalorder %s74, %s88
      %p90 = scmp.eq.s32.totalorder %s22, 0
      %p91 = por %p89, %p90
      %s93 = sadd.s32 %s92, 1
      %p96 = scmp.eq.s32.totalorder %s16, 1
      %p97 = scmp.ne.s32.totalorder %s92, %s94
      %p98 = scmp.eq.s32.totalorder %s16, 0
      %p99 = por %p97, %p98
      %p100 = scmp.ne.s32.totalorder %s92, %s94
      %p101 = scmp.eq.s32.totalorder %s21, 1
      %p102 = por %p100, %p101
      %p103 = scmp.ne.s32.totalorder %s94, %s95
      %p104 = scmp.eq.s32.totalorder %s21, 0
      %p105 = por %p103, %p104
      %p106 = scmp.ne.s32.totalorder %s94, %s95
      %p107 = scmp.eq.s32.totalorder %s22, 1
      %p108 = por %p106, %p107
      %p110 = scmp.ne.s32.totalorder %s95, %s109
      %p111 = scmp.eq.s32.totalorder %s22, 0
      %p112 = por %p110, %p111
      %s114 = sadd.s32 %s113, 1
      %p117 = scmp.eq.s32.totalorder %s16, 1
      %p118 = scmp.ne.s32.totalorder %s113, %s115
      %p119 = scmp.eq.s32.totalorder %s16, 0
      %p120 = por %p118, %p119
      %p121 = scmp.ne.s32.totalorder %s113, %s115
      %p122 = scmp.eq.s32.totalorder %s21, 1
      %p123 = por %p121, %p122
      %p124 = scmp.ne.s32.totalorder %s115, %s116
      %p125 = scmp.eq.s32.totalorder %s21, 0
      %p126 = por %p124, %p125
      %p127 = scmp.ne.s32.totalorder %s115, %s116
      %p128 = scmp.eq.s32.totalorder %s22, 1
      %p129 = por %p127, %p128
      %p131 = scmp.ne.s32.totalorder %s116, %s130
      %p132 = scmp.eq.s32.totalorder %s22, 0
      %p133 = por %p131, %p132
      %s134 = ssub.s32 %s16, %s23
      %p135 = scmp.eq.s32.totalorder %s134, 0
      %s137 = sadd.s32 %s136, 1
      %s138 = scalar_select %p135, %s136, %s137
      %p141 = pneg %p135
      %p142 = scmp.eq.s32.totalorder %s16, 1
      %p143 = por %p141, %p142
      %p144 = scmp.ne.s32.totalorder %s136, %s139
      %p145 = scmp.eq.s32.totalorder %s16, 0
      %p146 = por %p144, %p145
      %p147 = scmp.ne.s32.totalorder %s136, %s139
      %p148 = scmp.eq.s32.totalorder %s21, 1
      %p149 = por %p147, %p148
      %p150 = scmp.ne.s32.totalorder %s139, %s140
      %p151 = scmp.eq.s32.totalorder %s21, 0
      %p152 = por %p150, %p151
      %p153 = scmp.ne.s32.totalorder %s139, %s140
      %p154 = scmp.eq.s32.totalorder %s22, 1
      %p155 = por %p153, %p154
      %p157 = scmp.ne.s32.totalorder %s140, %s156
      %p158 = scmp.eq.s32.totalorder %s22, 0
      %p159 = por %p157, %p158
      %p160 = scmp.le.s32.totalorder 1, %s16
      %p161 = scmp.lt.s32.totalorder %s16, 3
      %p162 = pnand %p160, %p161
      %p163 = pneg %p162
      // Predicated region
      $region9: #{tpu_custom_call.1} parent=5 // pred_check
        _
      $region10: #{tpu_custom_call.1} parent=5 // pred_check_branch
        %165 = sbr.rel (%p162) target = $region12
      $region11: #{tpu_custom_call.1} parent=5 // pred_region
        %s166 = ssub.s32 %s16, 1
        // Predicated region
        $region13: #{tpu_custom_call.1} parent=11 // pred_check
          %p167 = pneg %p63
        $region14: #{tpu_custom_call.1} parent=11 // pred_check_branch
          %169 = sbr.rel (%p167) target = $region16
        $region15: #{tpu_custom_call.1} parent=11 // pred_region
          %171 = vsyncadd [#allocation3], 0
          %s172 = sshll.u32 %s1, 4
          %s173 = int_to_ptr.hbm [resolvable:$true] %s172
          %s174 = sshll.u32 [#allocation2], 4
          %s175 = int_to_ptr.vmem [resolvable:$true] %s174
          %180 = dma.hbm_to_vmem [thread:$0]  %s173, 768, %s175, [#allocation3], 64, 64, 4
        $region16: #{tpu_custom_call.1} parent=11 // pred_fallthru
          _
        // Predicated region
        $region17: #{tpu_custom_call.1} parent=11 // pred_check
          %p181 = pneg %p84
        $region18: #{tpu_custom_call.1} parent=11 // pred_check_branch
          %183 = sbr.rel (%p181) target = $region20
        $region19: #{tpu_custom_call.1} parent=11 // pred_region
          _
        $region20: #{tpu_custom_call.1} parent=11 // pred_fallthru
          _
        // Predicated region
        $region21: #{tpu_custom_call.1} parent=11 // pred_check
          %p184 = pneg %p105
        $region22: #{tpu_custom_call.1} parent=11 // pred_check_branch
          %186 = sbr.rel (%p184) target = $region24
        $region23: #{tpu_custom_call.1} parent=11 // pred_region
          %188 = vsyncadd [#allocation6], 0
          %s189 = sshll.u32 %s3, 4
          %s190 = int_to_ptr.hbm [resolvable:$true] %s189
          %s191 = sshll.u32 [#allocation5], 4
          %s192 = int_to_ptr.vmem [resolvable:$true] %s191
          %197 = dma.hbm_to_vmem [thread:$0]  %s190, 3072, %s192, [#allocation6], 64, 64, 4
        $region24: #{tpu_custom_call.1} parent=11 // pred_fallthru
          _
        // Predicated region
        $region25: #{tpu_custom_call.1} parent=11 // pred_check
          %p198 = pneg %p126
        $region26: #{tpu_custom_call.1} parent=11 // pred_check_branch
          %200 = sbr.rel (%p198) target = $region28
        $region27: #{tpu_custom_call.1} parent=11 // pred_region
          _
        $region28: #{tpu_custom_call.1} parent=11 // pred_fallthru
          _
      $region12: #{tpu_custom_call.1} parent=5 // pred_fallthru
        _
      %p201 = scmp.lt.s32.totalorder %s16, 2
      // Predicated region
      $region29: #{tpu_custom_call.1} parent=5 // pred_check
        %p202 = pneg %p201
      $region30: #{tpu_custom_call.1} parent=5 // pred_check_branch
        %204 = sbr.rel (%p202) target = $region32
      $region31: #{tpu_custom_call.1} parent=5 // pred_region
        // Predicated region
        $region33: #{tpu_custom_call.1} parent=31 // pred_check
          %p205 = pneg %p36
        $region34: #{tpu_custom_call.1} parent=31 // pred_check_branch
          %207 = sbr.rel (%p205) target = $region36
        $region35: #{tpu_custom_call.1} parent=31 // pred_region
          %p208 = scmp.lt.s32.totalorder %s16, 1
          %s209 = scalar_select %p208, %s16, 1
          %s210 = smul.addr %s209, 4
          %s211 = scalar_lea.vmem %s0, %s210
        $region36: #{tpu_custom_call.1} parent=31 // pred_fallthru
          _
      $region32: #{tpu_custom_call.1} parent=5 // pred_fallthru
        _
      %p212 = scmp.le.s32.totalorder 1, %s16
      %p213 = scmp.lt.s32.totalorder %s16, 3
      %p214 = pnand %p212, %p213
      %p215 = pneg %p214
      // Predicated region
      $region37: #{tpu_custom_call.1} parent=5 // pred_check
        _
      $region38: #{tpu_custom_call.1} parent=5 // pred_check_branch
        %217 = sbr.rel (%p214) target = $region40
      $region39: #{tpu_custom_call.1} parent=5 // pred_region
        %s218 = ssub.s32 %s16, 1
        // Predicated region
        $region41: #{tpu_custom_call.1} parent=39 // pred_check
          %p219 = pneg %p63
        $region42: #{tpu_custom_call.1} parent=39 // pred_check_branch
          %221 = sbr.rel (%p219) target = $region44
        $region43: #{tpu_custom_call.1} parent=39 // pred_region
          %223 = dma.done [#allocation3], 768
        $region44: #{tpu_custom_call.1} parent=39 // pred_fallthru
          _
        // Predicated region
        $region45: #{tpu_custom_call.1} parent=39 // pred_check
          %p224 = pneg %p105
        $region46: #{tpu_custom_call.1} parent=39 // pred_check_branch
          %226 = sbr.rel (%p224) target = $region48
        $region47: #{tpu_custom_call.1} parent=39 // pred_region
          %228 = dma.done [#allocation6], 3072
        $region48: #{tpu_custom_call.1} parent=39 // pred_fallthru
          _
        %p229 = scmp.lt.s32.totalorder %s21, 1
        %s230 = scalar_select %p229, %s21, 1
        %s231 = smul.addr %s230, 4
        %s232 = scalar_lea.vmem %s0, %s231
        %p233 = pneg %p42
        %p234 = pneg %p39
        %p235 = pneg %p63
        %p236 = pneg %p60
        %p237 = pneg %p84
        %p238 = pneg %p81
        %p239 = pneg %p105
        %p240 = pneg %p102
        %p241 = pneg %p126
        %p242 = pneg %p123
        %p243 = pneg %p152
        %p244 = pneg %p149
        %s245 = sand.u32 %s139, 1
        %s246 = scalar_lea.sflag [#allocation4], %s245
        %s247 = sand.u32 %s139, 1
        %s248 = smul.addr %s247, 4
        %s249 = scalar_lea.vmem [#allocation7], %s248
        %p250 = scmp.lt.s32.totalorder %s21, 1
        %s251 = scalar_select %p250, %s21, 1
        %s252 = smul.addr %s251, 4
        %s253 = scalar_lea.vmem %s0, %s252
        %v255 = vld [vmem:[%s253] sm:$0x7]
        %v256 = vld [vmem:[#allocation2] sm:$0xf]
        %v257 = vld [vmem:[#allocation2 + $0x4] sm:$0xf]
        %v258 = vld [vmem:[#allocation2 + $0x8] sm:$0xf]
        %v259 = vld [vmem:[#allocation2 + $0xc] sm:$0xf]
        %v260 = vld [vmem:[#allocation2 + $0x10] sm:$0xf]
        %v261 = vld [vmem:[#allocation2 + $0x14] sm:$0xf]
        %v262 = vld [vmem:[#allocation2 + $0x18] sm:$0xf]
        %v263 = vld [vmem:[#allocation2 + $0x1c] sm:$0xf]
        %v264 = vld [vmem:[#allocation2 + $0x20] sm:$0xf]
        %v265 = vld [vmem:[#allocation2 + $0x24] sm:$0xf]
        %v266 = vld [vmem:[#allocation2 + $0x28] sm:$0xf]
        %v267 = vld [vmem:[#allocation2 + $0x2c] sm:$0xf]
        %v269 = vunpack.c.l.b16 %v255
        %v270 = vpack.c.b16 %v269, %v269
        %v272 = vshrl.u32 %v270, 16
        %v274 = vshll.u32 %v270, 16
        %v276 = vrot.slane %v274, 1
        %v277 = vor.u32 %v272, %v276
        %v282 = vunpack.c.l.b16 %v264
        %v283 = vunpack.c.l.b16 %v265
        %v284 = vunpack.c.l.b16 %v266
        %v285 = vunpack.c.l.b16 %v267
        %v286 = vpack.c.b16 %v283, %v282
        %v287 = vpack.c.b16 %v285, %v284
        %vm290 = vcmask 261120
        %v292 = vsel %vm290, %v277, 0
        %294 = vmatpush.bf16.msra.mxu0 0
        %295 = vmatpush.bf16.msra.mxu0 0
        %296 = vmatpush.bf16.msra.mxu0 0
        %297 = vmatpush.bf16.msra.mxu0 0
        %298 = vmatpush.bf16.msra.mxu0 0
        %299 = vmatpush.bf16.msra.mxu0 0
        %300 = vmatpush.bf16.msra.mxu0 %v287
        %301 = vmatpush.bf16.msra.mxu0 %v286
        %302 = vmatmul.bf16.gmra.mxu0 %v292
        %v303 = vpop.f32.mrf.mxu0
        %v304 = vadd.f32 0.0, %v303
        %v305 = vpop.f32.mrf.mxu0
        %306 = vdwg.mxu0
        %307 = vrot.lane.b32.xlu0 %v270, 64
        %v308 = vpop.permute.xlu0 %307
        %v317 = vunpack.c.l.b16 %v256
        %v318 = vunpack.c.l.b16 %v257
        %v319 = vunpack.c.l.b16 %v258
        %v320 = vunpack.c.l.b16 %v259
        %v321 = vunpack.c.l.b16 %v260
        %v322 = vunpack.c.l.b16 %v261
        %v323 = vunpack.c.l.b16 %v262
        %v324 = vunpack.c.l.b16 %v263
        %v325 = vpack.c.b16 %v318, %v317
        %v326 = vpack.c.b16 %v320, %v319
        %v327 = vpack.c.b16 %v322, %v321
        %v328 = vpack.c.b16 %v324, %v323
        %vm333 = vcmask 523264
        %v335 = vsel %vm333, %v308, 0
        %337 = vmatpush.bf16.msra.mxu0 0
        %338 = vmatpush.bf16.msra.mxu0 0
        %339 = vmatpush.bf16.msra.mxu0 0
        %340 = vmatpush.bf16.msra.mxu0 0
        %341 = vmatpush.bf16.msra.mxu0 %v328
        %342 = vmatpush.bf16.msra.mxu0 %v327
        %343 = vmatpush.bf16.msra.mxu0 %v326
        %344 = vmatpush.bf16.msra.mxu0 %v325
        %345 = vmatmul.bf16.gmra.mxu0 %v335
        %v346 = vpop.f32.mrf.mxu0
        %v347 = vadd.f32 %v304, %v346
        %v348 = vpop.f32.mrf.mxu0
        %349 = vdwg.mxu0
        %v350 = vld [vmem:[%s2] sm:$0x1]
        %v352 = vperm.slane %v350, 0
        %vm354 = vcmask 785408
        %v356 = vsel %vm354, %v255, 0
        %358 = vmatpush.bf16.msra.mxu0 0
        %359 = vmatpush.bf16.msra.mxu0 0
        %360 = vmatpush.bf16.msra.mxu0 %v287
        %361 = vmatpush.bf16.msra.mxu0 %v286
        %362 = vmatpush.bf16.msra.mxu0 %v328
        %363 = vmatpush.bf16.msra.mxu0 %v327
        %364 = vmatpush.bf16.msra.mxu0 %v326
        %365 = vmatpush.bf16.msra.mxu0 %v325
        %366 = vmatmul.bf16.gmra.mxu0 %v356
        %v367 = vpop.f32.mrf.mxu0
        %v368 = vadd.f32 %v352, %v367
        %v369 = vpop.f32.mrf.mxu0
        %370 = vdwg.mxu0
        %v371 = vmax.f32 %v368, 0.0
        %v372 = vpack.c.bf16 %v371, %v371
        %v373 = vadd.f32 %v347, %v352
        %v374 = vmax.f32 %v373, 0.0
        %v375 = vpack.c.bf16 %v374, %v374
        %v376 = vld [vmem:[#allocation5] sm:$0xf]
        %v377 = vld [vmem:[#allocation5 + $0x4] sm:$0xf]
        %v378 = vld [vmem:[#allocation5 + $0x8] sm:$0xf]
        %v379 = vld [vmem:[#allocation5 + $0xc] sm:$0xf]
        %v380 = vld [vmem:[#allocation5 + $0x10] sm:$0xf]
        %v381 = vld [vmem:[#allocation5 + $0x14] sm:$0xf]
        %v382 = vld [vmem:[#allocation5 + $0x18] sm:$0xf]
        %v383 = vld [vmem:[#allocation5 + $0x1c] sm:$0xf]
        %v384 = vld [vmem:[#allocation5 + $0x20] sm:$0xf]
        %v385 = vld [vmem:[#allocation5 + $0x24] sm:$0xf]
        %v386 = vld [vmem:[#allocation5 + $0x28] sm:$0xf]
        %v387 = vld [vmem:[#allocation5 + $0x2c] sm:$0xf]
        %v388 = vld [vmem:[#allocation5 + $0x30] sm:$0xf]
        %v389 = vld [vmem:[#allocation5 + $0x34] sm:$0xf]
        %v390 = vld [vmem:[#allocation5 + $0x38] sm:$0xf]
        %v391 = vld [vmem:[#allocation5 + $0x3c] sm:$0xf]
        %v392 = vld [vmem:[#allocation5 + $0x40] sm:$0xf]
        %v393 = vld [vmem:[#allocation5 + $0x44] sm:$0xf]
        %v394 = vld [vmem:[#allocation5 + $0x48] sm:$0xf]
        %v395 = vld [vmem:[#allocation5 + $0x4c] sm:$0xf]
        %v396 = vld [vmem:[#allocation5 + $0x50] sm:$0xf]
        %v397 = vld [vmem:[#allocation5 + $0x54] sm:$0xf]
        %v398 = vld [vmem:[#allocation5 + $0x58] sm:$0xf]
        %v399 = vld [vmem:[#allocation5 + $0x5c] sm:$0xf]
        %v400 = vld [vmem:[#allocation5 + $0x60] sm:$0xf]
        %v401 = vld [vmem:[#allocation5 + $0x64] sm:$0xf]
        %v402 = vld [vmem:[#allocation5 + $0x68] sm:$0xf]
        %v403 = vld [vmem:[#allocation5 + $0x6c] sm:$0xf]
        %v404 = vld [vmem:[#allocation5 + $0x70] sm:$0xf]
        %v405 = vld [vmem:[#allocation5 + $0x74] sm:$0xf]
        %v406 = vld [vmem:[#allocation5 + $0x78] sm:$0xf]
        %v407 = vld [vmem:[#allocation5 + $0x7c] sm:$0xf]
        %v408 = vld [vmem:[#allocation5 + $0x80] sm:$0xf]
        %v409 = vld [vmem:[#allocation5 + $0x84] sm:$0xf]
        %v410 = vld [vmem:[#allocation5 + $0x88] sm:$0xf]
        %v411 = vld [vmem:[#allocation5 + $0x8c] sm:$0xf]
        %v412 = vld [vmem:[#allocation5 + $0x90] sm:$0xf]
        %v413 = vld [vmem:[#allocation5 + $0x94] sm:$0xf]
        %v414 = vld [vmem:[#allocation5 + $0x98] sm:$0xf]
        %v415 = vld [vmem:[#allocation5 + $0x9c] sm:$0xf]
        %v416 = vld [vmem:[#allocation5 + $0xa0] sm:$0xf]
        %v417 = vld [vmem:[#allocation5 + $0xa4] sm:$0xf]
        %v418 = vld [vmem:[#allocation5 + $0xa8] sm:$0xf]
        %v419 = vld [vmem:[#allocation5 + $0xac] sm:$0xf]
        %v420 = vld [vmem:[#allocation5 + $0xb0] sm:$0xf]
        %v421 = vld [vmem:[#allocation5 + $0xb4] sm:$0xf]
        %v422 = vld [vmem:[#allocation5 + $0xb8] sm:$0xf]
        %v423 = vld [vmem:[#allocation5 + $0xbc] sm:$0xf]
        %v456 = vunpack.c.l.b16 %v376
        %v457 = vunpack.c.l.b16 %v377
        %v458 = vunpack.c.l.b16 %v378
        %v459 = vunpack.c.l.b16 %v379
        %v460 = vunpack.c.l.b16 %v380
        %v461 = vunpack.c.l.b16 %v381
        %v462 = vunpack.c.l.b16 %v382
        %v463 = vunpack.c.l.b16 %v383
        %v464 = vunpack.c.l.b16 %v384
        %v465 = vunpack.c.l.b16 %v385
        %v466 = vunpack.c.l.b16 %v386
        %v467 = vunpack.c.l.b16 %v387
        %v468 = vunpack.c.l.b16 %v388
        %v469 = vunpack.c.l.b16 %v389
        %v470 = vunpack.c.l.b16 %v390
        %v471 = vunpack.c.l.b16 %v391
        %v472 = vunpack.c.l.b16 %v392
        %v473 = vunpack.c.l.b16 %v393
        %v474 = vunpack.c.l.b16 %v394
        %v475 = vunpack.c.l.b16 %v395
        %v476 = vunpack.c.l.b16 %v396
        %v477 = vunpack.c.l.b16 %v397
        %v478 = vunpack.c.l.b16 %v398
        %v479 = vunpack.c.l.b16 %v399
        %v480 = vunpack.c.l.b16 %v400
        %v481 = vunpack.c.l.b16 %v401
        %v482 = vunpack.c.l.b16 %v402
        %v483 = vunpack.c.l.b16 %v403
        %v484 = vunpack.c.l.b16 %v404
        %v485 = vunpack.c.l.b16 %v405
        %v486 = vunpack.c.l.b16 %v406
        %v487 = vunpack.c.l.b16 %v407
        %v488 = vpack.c.b16 %v457, %v456
        %v489 = vpack.c.b16 %v459, %v458
        %v490 = vpack.c.b16 %v461, %v460
        %v491 = vpack.c.b16 %v463, %v462
        %v492 = vpack.c.b16 %v465, %v464
        %v493 = vpack.c.b16 %v467, %v466
        %v494 = vpack.c.b16 %v469, %v468
        %v495 = vpack.c.b16 %v471, %v470
        %v496 = vpack.c.b16 %v473, %v472
        %v497 = vpack.c.b16 %v475, %v474
        %v498 = vpack.c.b16 %v477, %v476
        %v499 = vpack.c.b16 %v479, %v478
        %v500 = vpack.c.b16 %v481, %v480
        %v501 = vpack.c.b16 %v483, %v482
        %v502 = vpack.c.b16 %v485, %v484
        %v503 = vpack.c.b16 %v487, %v486
        %520 = vmatpush.bf16.msra.mxu0 %v495
        %521 = vmatpush.bf16.msra.mxu0 %v494
        %522 = vmatpush.bf16.msra.mxu0 %v493
        %523 = vmatpush.bf16.msra.mxu0 %v492
        %524 = vmatpush.bf16.msra.mxu0 %v491
        %525 = vmatpush.bf16.msra.mxu0 %v490
        %526 = vmatpush.bf16.msra.mxu0 %v489
        %527 = vmatpush.bf16.msra.mxu0 %v488
        %528 = vmatmul.bf16.gmra.mxu0 %v372
        %v529 = vpop.f32.mrf.mxu0
        %v530 = vadd.f32 0.0, %v529
        %v531 = vpop.f32.mrf.mxu0
        %532 = vdwg.mxu0
        %533 = vmatpush.bf16.msra.mxu0 %v503
        %534 = vmatpush.bf16.msra.mxu0 %v502
        %535 = vmatpush.bf16.msra.mxu0 %v501
        %536 = vmatpush.bf16.msra.mxu0 %v500
        %537 = vmatpush.bf16.msra.mxu0 %v499
        %538 = vmatpush.bf16.msra.mxu0 %v498
        %539 = vmatpush.bf16.msra.mxu0 %v497
        %540 = vmatpush.bf16.msra.mxu0 %v496
        %541 = vmatmul.bf16.gmra.mxu0 %v375
        %v542 = vpop.f32.mrf.mxu0
        %v543 = vadd.f32 %v530, %v542
        %v544 = vpop.f32.mrf.mxu0
        %545 = vdwg.mxu0
        %v547 = vrot.slane %v543, 7
        %vm549 = vcmask 1040384
        %v550 = vsel %vm549, 0.0, %v547
        %v567 = vunpack.c.l.b16 %v408
        %v568 = vunpack.c.l.b16 %v409
        %v569 = vunpack.c.l.b16 %v410
        %v570 = vunpack.c.l.b16 %v411
        %v571 = vunpack.c.l.b16 %v412
        %v572 = vunpack.c.l.b16 %v413
        %v573 = vunpack.c.l.b16 %v414
        %v574 = vunpack.c.l.b16 %v415
        %v575 = vunpack.c.l.b16 %v416
        %v576 = vunpack.c.l.b16 %v417
        %v577 = vunpack.c.l.b16 %v418
        %v578 = vunpack.c.l.b16 %v419
        %v579 = vunpack.c.l.b16 %v420
        %v580 = vunpack.c.l.b16 %v421
        %v581 = vunpack.c.l.b16 %v422
        %v582 = vunpack.c.l.b16 %v423
        %v583 = vpack.c.b16 %v568, %v567
        %v584 = vpack.c.b16 %v570, %v569
        %v585 = vpack.c.b16 %v572, %v571
        %v586 = vpack.c.b16 %v574, %v573
        %v587 = vpack.c.b16 %v576, %v575
        %v588 = vpack.c.b16 %v578, %v577
        %v589 = vpack.c.b16 %v580, %v579
        %v590 = vpack.c.b16 %v582, %v581
        %599 = vmatpush.bf16.msra.mxu0 %v590
        %600 = vmatpush.bf16.msra.mxu0 %v589
        %601 = vmatpush.bf16.msra.mxu0 %v588
        %602 = vmatpush.bf16.msra.mxu0 %v587
        %603 = vmatpush.bf16.msra.mxu0 %v586
        %604 = vmatpush.bf16.msra.mxu0 %v585
        %605 = vmatpush.bf16.msra.mxu0 %v584
        %606 = vmatpush.bf16.msra.mxu0 %v583
        %607 = vmatmul.bf16.gmra.mxu0 %v372
        %v608 = vpop.f32.mrf.mxu0
        %v609 = vadd.f32 %v550, %v608
        %v610 = vpop.f32.mrf.mxu0
        %611 = vdwg.mxu0
        %v612 = vld [vmem:[%s4] sm:$0x1]
        %v614 = vperm.slane %v612, 0
        %v616 = vadd.f32 %v609, %v614
        %v617 = vmax.f32 %v616, 0.0
        %618 = vst [vmem:[%s249] sm:$0xf] %v617
        %s619 = sand.u32 %s139, 1
        %s620 = scalar_lea.sflag [#allocation4], %s619
        %s621 = sand.u32 %s139, 1
        %s622 = smul.addr %s621, 4
        %s623 = scalar_lea.vmem [#allocation7], %s622
        // Predicated region
        $region49: #{tpu_custom_call.1} parent=39 // pred_check
          %p624 = pneg %p149
        $region50: #{tpu_custom_call.1} parent=39 // pred_check_branch
          %626 = sbr.rel (%p624) target = $region52
        $region51: #{tpu_custom_call.1} parent=39 // pred_region
          %628 = vsyncadd %s620, 0
          %s629 = smul.addr %s21, 4
          %s630 = scalar_lea.hbm %s5, %s629
          %s632 = sshll.u32 %s623, 4
          %s633 = int_to_ptr.vmem [resolvable:$true] %s632
          %s634 = sshll.u32 %s630, 4
          %s635 = int_to_ptr.hbm [resolvable:$true] %s634
          %637 = dma.vmem_to_hbm [thread:$0]  %s633, 64, %s635, %s620
        $region52: #{tpu_custom_call.1} parent=39 // pred_fallthru
          _
      $region40: #{tpu_custom_call.1} parent=5 // pred_fallthru
        _
      %p638 = scmp.le.s32.totalorder 2, %s16
      // Predicated region
      $region53: #{tpu_custom_call.1} parent=5 // pred_check
        %p639 = pneg %p638
      $region54: #{tpu_custom_call.1} parent=5 // pred_check_branch
        %641 = sbr.rel (%p639) target = $region56
      $region55: #{tpu_custom_call.1} parent=5 // pred_region
        %s642 = ssub.s32 %s16, 2
        // Predicated region
        $region57: #{tpu_custom_call.1} parent=55 // pred_check
          %p643 = pneg %p155
        $region58: #{tpu_custom_call.1} parent=55 // pred_check_branch
          %645 = sbr.rel (%p643) target = $region60
        $region59: #{tpu_custom_call.1} parent=55 // pred_region
          %s646 = sand.u32 %s140, 1
          %s647 = scalar_lea.sflag [#allocation4], %s646
          %s648 = sand.u32 %s140, 1
          %s649 = smul.addr %s648, 4
          %s650 = scalar_lea.vmem [#allocation7], %s649
          %652 = dma.done %s647, 64
        $region60: #{tpu_custom_call.1} parent=55 // pred_fallthru
          _
      $region56: #{tpu_custom_call.1} parent=5 // pred_fallthru
        _
    $region6: #{tpu_custom_call.1} parent=1 // loop_footer
      %s20 = sadd.s32 1, %s16
    $region7: #{tpu_custom_call.1} parent=1 // loop_footer_branch
      %15 = sbr.rel target = $region3
    $region8: #{tpu_custom_call.1} parent=1 // loop_exit
      _
    %653 = vsyncpa [#allocation3], 1
    %s654 = scalar_lea.sflag [#allocation3], 1
    %655 = vsyncpa %s654, 1
    %656 = vsyncpa [#allocation6], 1
    %657 = vsyncpa [#allocation4], 1
    %s658 = scalar_lea.sflag [#allocation4], 1
    %659 = vsyncpa %s658, 1

</llo_original>
